<compile_context>
chip_gen: v6e
topology: v6e:2x2x1
jax: 0.10.0
libtpu: 0.0.40
codegen_flags: <defaults>
</compile_context>

<pallas_src>
import jax
import jax.numpy as jnp
from jax.experimental import pallas as pl
from jax.experimental.pallas import tpu as pltpu


# ---------------------------------------------------------------------------
# Config (only the fields QuantumMindLayer uses)
# ---------------------------------------------------------------------------
class Cfg:
    hid = 32     # cfg.hid
    q_dim = 16   # cfg.q_dim


# ---------------------------------------------------------------------------
# Exact GELU (erf-based, matches nn.GELU() default)
# ---------------------------------------------------------------------------
_SQRT1_2 = 0.7071067811865476


def _erf(z):
    # Abramowitz & Stegun 7.1.26 rational approximation, |error| <= 1.5e-7.
    p = 0.3275911
    a1, a2, a3, a4, a5 = (0.254829592, -0.284496736, 1.421413741,
                          -1.453152027, 1.061405429)
    za = jnp.abs(z)
    t = 1.0 / (1.0 + p * za)
    poly = ((((a5 * t + a4) * t + a3) * t + a2) * t + a1) * t
    y = 1.0 - poly * jnp.exp(-za * za)
    return jnp.where(z >= 0.0, y, -y)


def _gelu_exact(x):
    return 0.5 * x * (1.0 + _erf(x * _SQRT1_2))


# ---------------------------------------------------------------------------
# Fused kernel: x_folded -> (blkdiag proj_r|proj_i) -> GELU -> blkdiag fuse_g
# ---------------------------------------------------------------------------
def qml_kernel(x_ref, wri_ref, bri_ref, wf_ref, bf_ref, o_ref):
    x = x_ref[...]                                                    # (tm, fold*H)
    h = jnp.dot(x, wri_ref[...], preferred_element_type=jnp.float32)
    h = h + bri_ref[...].astype(jnp.float32)                          # (tm, fold*2Q)
    a = _gelu_exact(h)                                                # GELU(cat(real,imag)) per token
    o = jnp.dot(a.astype(wf_ref.dtype), wf_ref[...],
                preferred_element_type=jnp.float32)
    o_ref[...] = (o + bf_ref[...].astype(jnp.float32)).astype(o_ref.dtype)


def quantum_mind_forward(packed, x, *, tm=128):
    """x: (B, S, hid) -> (B, S, hid), same dtype as x.

    tm = rows of the folded (width-128) tile per grid step when tiling over M.
    """
    B, S, H = x.shape
    fold = packed['fold']
    Hf = H * fold
    M = B * S
    cdt = packed['wri'].dtype

    x2 = x.reshape(M, H).astype(cdt)
    pad = (-M) % fold
    if pad:
        x2 = jnp.pad(x2, ((0, pad), (0, 0)))
    Mf = (M + pad) // fold
    xf = x2.reshape(Mf, Hf)                    # contiguous view: fold tokens per row

    args = (xf, packed['wri'], packed['bri'], packed['wf'], packed['bf'])

    if Mf <= tm:
        # Single shot: whole arrays resident in VMEM, no grid pipeline / double-buffering.
        vmem = pl.BlockSpec(memory_space=pltpu.MemorySpace.VMEM)
        out = pl.pallas_call(
            qml_kernel,
            out_shape=jax.ShapeDtypeStruct((Mf, Hf), cdt),
            in_specs=[vmem] * len(args),
            out_specs=vmem,
        )(*args)
    else:
        # Tile over (folded) rows; weights/biases loaded once via constant index_maps.
        grid = (pl.cdiv(Mf, tm),)
        out = pl.pallas_call(
            qml_kernel,
            grid=grid,
            out_shape=jax.ShapeDtypeStruct((Mf, Hf), cdt),
            in_specs=[
                pl.BlockSpec((tm, Hf), lambda i: (i, 0)),
                pl.BlockSpec(packed['wri'].shape, lambda i: (0, 0)),
                pl.BlockSpec(packed['bri'].shape, lambda i: (0, 0)),
                pl.BlockSpec(packed['wf'].shape, lambda i: (0, 0)),
                pl.BlockSpec(packed['bf'].shape, lambda i: (0, 0)),
            ],
            out_specs=pl.BlockSpec((tm, Hf), lambda i: (i, 0)),
            compiler_params=pltpu.CompilerParams(
                dimension_semantics=("parallel",)),
        )(*args)

    out = out.reshape(M + pad, H)
    if pad:
        out = out[:M]
    return out.reshape(B, S, H).astype(x.dtype)


# ---------------------------------------------------------------------------
# Parameter init (PyTorch layout) + ONE-TIME kernel re-layout (lane-dense fold)
# ---------------------------------------------------------------------------
def init_params(cfg, key, compute_dtype=jnp.float32):
    # compute_dtype=jnp.bfloat16 is the recommended setting on v6e/v7x
    # (halves HBM/VMEM bytes, doubles vreg density); keep f32 on v5e.
    H, Q = cfg.hid, cfg.q_dim
    ks = jax.random.split(key, 6)

    def w(k, shape, scale=0.1):
        return scale * jax.random.normal(k, shape, jnp.float32)

    raw = {
        'proj_r_w': w(ks[0], (Q, H)), 'proj_r_b': w(ks[1], (Q,)),
        'proj_i_w': w(ks[2], (Q, H)), 'proj_i_b': w(ks[3], (Q,)),
        'fuse_g_w': w(ks[4], (H, 2 * Q)), 'fuse_g_b': w(ks[5], (H,)),
    }

    # concat fold (exact because GELU is elementwise) + pre-transpose:
    wri_t = jnp.concatenate([raw['proj_r_w'].T, raw['proj_i_w'].T], axis=1)  # (H, 2Q)
    b_ri = jnp.concatenate([raw['proj_r_b'], raw['proj_i_b']])               # (2Q,)
    wf_t = raw['fuse_g_w'].T                                                 # (2Q, H)
    b_f = raw['fuse_g_b']                                                    # (H,)

    # Lane-dense fold: pack FOLD tokens onto the 128-lane axis with block-diagonal
    # weights (exactly equivalent math, token segments are independent).
    fold = 128 // H if (H <= 128 and 128 % H == 0) else 1
    eye = jnp.eye(fold, dtype=jnp.float32)
    packed = {
        'fold': fold,
        'wri': jnp.kron(eye, wri_t).astype(compute_dtype),            # (fold*H, fold*2Q)
        'bri': jnp.tile(b_ri, fold)[None, :].astype(compute_dtype),   # (1, fold*2Q)
        'wf':  jnp.kron(eye, wf_t).astype(compute_dtype),             # (fold*2Q, fold*H)
        'bf':  jnp.tile(b_f, fold)[None, :].astype(compute_dtype),    # (1, fold*H)
    }
    return raw, packed


# ---------------------------------------------------------------------------
# Pure-JAX reference (mirrors the PyTorch forward exactly)
# ---------------------------------------------------------------------------
def reference(raw, x):
    real = jax.nn.gelu(x @ raw['proj_r_w'].T + raw['proj_r_b'], approximate=False)
    imag = jax.nn.gelu(x @ raw['proj_i_w'].T + raw['proj_i_b'], approximate=False)
    return jnp.concatenate([real, imag], axis=-1) @ raw['fuse_g_w'].T + raw['fuse_g_b']


if __name__ == "__main__":
    cfg = Cfg()
    key = jax.random.PRNGKey(0)
    kp, kx1, kx2 = jax.random.split(key, 3)
    raw, packed = init_params(cfg, kp)   # f32 for the tight correctness check

    # --- primary small-shape check (single-shot, whole-array VMEM path) ----
    B, S = 2, 8
    x = jax.random.normal(kx1, (B, S, cfg.hid), jnp.float32)
    out = jax.block_until_ready(quantum_mind_forward(packed, x))
    assert out.shape == (B, S, cfg.hid)
    assert bool(jnp.all(jnp.isfinite(out)))
    ref = reference(raw, x)
    max_err = float(jnp.max(jnp.abs(out - ref)))
    assert bool(jnp.allclose(out, ref, atol=1e-4, rtol=1e-4)), max_err

    # --- larger batch exercising the M-tiled "parallel" grid path ----------
    B2, S2 = 2, 2048   # folded rows = 1024 -> 8 grid steps at tm=128
    x2 = jax.random.normal(kx2, (B2, S2, cfg.hid), jnp.float32)
    out2 = jax.block_until_ready(quantum_mind_forward(packed, x2))
    ref2 = reference(raw, x2)
    max_err2 = float(jnp.max(jnp.abs(out2 - ref2)))
    assert bool(jnp.allclose(out2, ref2, atol=1e-4, rtol=1e-4)), max_err2

    print("KERNEL_OK")
</pallas_src>

<mosaic_0001>
module attributes {stable_mosaic.version = 11 : i64} {
  func.func @qml_kernel(%arg0: memref<4x128xf32, #tpu.memory_space<vmem>>, %arg1: memref<128x128xf32, #tpu.memory_space<vmem>>, %arg2: memref<1x128xf32, #tpu.memory_space<vmem>>, %arg3: memref<128x128xf32, #tpu.memory_space<vmem>>, %arg4: memref<1x128xf32, #tpu.memory_space<vmem>>, %arg5: memref<4x128xf32, #tpu.memory_space<vmem>>) attributes {dimension_semantics = [], scalar_prefetch = 0 : i64, scratch_operands = 0 : i64, tpu.core_type = #tpu.core_type<tc>} {
    %c0 = arith.constant 0 : index
    %c0_0 = arith.constant 0 : index
    %0 = vector.load %arg0[%c0, %c0_0] : memref<4x128xf32, #tpu.memory_space<vmem>>, vector<4x128xf32>
    %c0_1 = arith.constant 0 : index
    %c0_2 = arith.constant 0 : index
    %1 = vector.load %arg1[%c0_1, %c0_2] : memref<128x128xf32, #tpu.memory_space<vmem>>, vector<128x128xf32>
    %cst = arith.constant dense<0.000000e+00> : vector<4x128xf32>
    %2 = tpu.matmul %0, %1, %cst {dimension_numbers = #tpu.dot_dimension_numbers<[1], [0], [0], [1], [0, 0, 1, 1], [], []>} : vector<4x128xf32>, vector<128x128xf32>, vector<4x128xf32> -> vector<4x128xf32>
    %c0_3 = arith.constant 0 : index
    %c0_4 = arith.constant 0 : index
    %3 = vector.load %arg2[%c0_3, %c0_4] : memref<1x128xf32, #tpu.memory_space<vmem>>, vector<1x128xf32>
    %4 = vector.broadcast %3 : vector<1x128xf32> to vector<4x128xf32>
    %5 = arith.addf %2, %4 : vector<4x128xf32>
    %cst_5 = arith.constant 5.000000e-01 : f32
    %6 = vector.broadcast %cst_5 : f32 to vector<4x128xf32>
    %7 = arith.mulf %6, %5 : vector<4x128xf32>
    %cst_6 = arith.constant 0.707106769 : f32
    %8 = vector.broadcast %cst_6 : f32 to vector<4x128xf32>
    %9 = arith.mulf %5, %8 : vector<4x128xf32>
    %10 = math.absf %9 : vector<4x128xf32>
    %cst_7 = arith.constant 0.327591091 : f32
    %11 = vector.broadcast %cst_7 : f32 to vector<4x128xf32>
    %12 = arith.mulf %11, %10 : vector<4x128xf32>
    %cst_8 = arith.constant 1.000000e+00 : f32
    %13 = vector.broadcast %cst_8 : f32 to vector<4x128xf32>
    %14 = arith.addf %13, %12 : vector<4x128xf32>
    %cst_9 = arith.constant 1.000000e+00 : f32
    %15 = vector.broadcast %cst_9 : f32 to vector<4x128xf32>
    %16 = arith.divf %15, %14 : vector<4x128xf32>
    %cst_10 = arith.constant 1.06140542 : f32
    %17 = vector.broadcast %cst_10 : f32 to vector<4x128xf32>
    %18 = arith.mulf %17, %16 : vector<4x128xf32>
    %cst_11 = arith.constant -1.45315206 : f32
    %19 = vector.broadcast %cst_11 : f32 to vector<4x128xf32>
    %20 = arith.addf %18, %19 : vector<4x128xf32>
    %21 = arith.mulf %20, %16 : vector<4x128xf32>
    %cst_12 = arith.constant 1.42141378 : f32
    %22 = vector.broadcast %cst_12 : f32 to vector<4x128xf32>
    %23 = arith.addf %21, %22 : vector<4x128xf32>
    %24 = arith.mulf %23, %16 : vector<4x128xf32>
    %cst_13 = arith.constant -0.284496725 : f32
    %25 = vector.broadcast %cst_13 : f32 to vector<4x128xf32>
    %26 = arith.addf %24, %25 : vector<4x128xf32>
    %27 = arith.mulf %26, %16 : vector<4x128xf32>
    %cst_14 = arith.constant 0.254829586 : f32
    %28 = vector.broadcast %cst_14 : f32 to vector<4x128xf32>
    %29 = arith.addf %27, %28 : vector<4x128xf32>
    %30 = arith.mulf %29, %16 : vector<4x128xf32>
    %cst_15 = arith.constant 0.000000e+00 : f32
    %31 = vector.broadcast %cst_15 : f32 to vector<4x128xf32>
    %32 = arith.subf %31, %10 : vector<4x128xf32>
    %33 = arith.mulf %32, %10 : vector<4x128xf32>
    %34 = math.exp %33 : vector<4x128xf32>
    %35 = arith.mulf %30, %34 : vector<4x128xf32>
    %cst_16 = arith.constant 1.000000e+00 : f32
    %36 = vector.broadcast %cst_16 : f32 to vector<4x128xf32>
    %37 = arith.subf %36, %35 : vector<4x128xf32>
    %cst_17 = arith.constant 0.000000e+00 : f32
    %38 = vector.broadcast %cst_17 : f32 to vector<4x128xf32>
    %39 = arith.cmpf oge, %9, %38 : vector<4x128xf32>
    %cst_18 = arith.constant 0.000000e+00 : f32
    %40 = vector.broadcast %cst_18 : f32 to vector<4x128xf32>
    %41 = arith.subf %40, %37 : vector<4x128xf32>
    %42 = arith.select %39, %37, %41 : vector<4x128xi1>, vector<4x128xf32>
    %cst_19 = arith.constant 1.000000e+00 : f32
    %43 = vector.broadcast %cst_19 : f32 to vector<4x128xf32>
    %44 = arith.addf %43, %42 : vector<4x128xf32>
    %45 = arith.mulf %7, %44 : vector<4x128xf32>
    %c0_20 = arith.constant 0 : index
    %c0_21 = arith.constant 0 : index
    %46 = vector.load %arg3[%c0_20, %c0_21] : memref<128x128xf32, #tpu.memory_space<vmem>>, vector<128x128xf32>
    %cst_22 = arith.constant dense<0.000000e+00> : vector<4x128xf32>
    %47 = tpu.matmul %45, %46, %cst_22 {dimension_numbers = #tpu.dot_dimension_numbers<[1], [0], [0], [1], [0, 0, 1, 1], [], []>} : vector<4x128xf32>, vector<128x128xf32>, vector<4x128xf32> -> vector<4x128xf32>
    %c0_23 = arith.constant 0 : index
    %c0_24 = arith.constant 0 : index
    %48 = vector.load %arg4[%c0_23, %c0_24] : memref<1x128xf32, #tpu.memory_space<vmem>>, vector<1x128xf32>
    %49 = vector.broadcast %48 : vector<1x128xf32> to vector<4x128xf32>
    %50 = arith.addf %47, %49 : vector<4x128xf32>
    %c0_25 = arith.constant 0 : index
    %c0_26 = arith.constant 0 : index
    %51 = vector.load %arg5[%c0_25, %c0_26] : memref<4x128xf32, #tpu.memory_space<vmem>>, vector<4x128xf32>
    tpu.vector_store %arg5[%c0_25, %c0_26], %50 {strides = array<i32>} : memref<4x128xf32, #tpu.memory_space<vmem>>, vector<4x128xf32>,
    return
  }
}

</mosaic_0001>

<llo_original>
// kernel: tpu_custom_call.1
$region0: #{tpu_custom_call.1}
  #allocation0 [shape = 'u32[]', space=smem, size = 0x4, offset = 0x4, fixed_abs, tag = 'smem constant byte address 0x4 - core index']
  #allocation1 [shape = 'u32[144,128]{1,0:T(1,128)}', space=vmem, size = 0x12000, scoped, tag = 'internal scratch']
  %s0 = inlined_call_operand.hbm [shape: f32[4,128], index: 0, kind: input, shape index: {}]
  %s1 = inlined_call_operand.hbm [shape: f32[128,128], index: 1, kind: input, shape index: {}]
  %s2 = inlined_call_operand.vmem [shape: f32[1,128], index: 2, kind: input, shape index: {}]
  %s3 = inlined_call_operand.hbm [shape: f32[128,128], index: 3, kind: input, shape index: {}]
  %s4 = inlined_call_operand.vmem [shape: f32[1,128], index: 4, kind: input, shape index: {}]
  %s5 = inlined_call_operand.hbm [shape: f32[4,128], index: 5, kind: output, shape index: {}]
  %s6 = sld [smem:[#allocation0]]
  $region42: #{tpu_custom_call.1} parent=0
    _
  %s8 = ssub.s32 1, %s6
  %s9 = scalar_select 0, %s8, %s6
  $region1: #{tpu_custom_call.1} parent=0
    #allocation2 [shape = 'u8[2048]{0}', space=vmem, size = 0x800, scoped, tag = 'input window, operand 0, single buffered']
    #allocation3 [shape = 's32[1]{0}', space=sflag, size = 0x4, scoped, tag = 'scoped memory for tpu_custom_call.1']
    #allocation4 [shape = 's32[1]{0}', space=sflag, size = 0x4, scoped, tag = 'scoped memory for tpu_custom_call.1']
    #allocation5 [shape = 'u8[65536]{0}', space=vmem, size = 0x10000, scoped, tag = 'input window, operand 1, single buffered']
    #allocation6 [shape = 's32[1]{0}', space=sflag, size = 0x4, scoped, tag = 'scoped memory for tpu_custom_call.1']
    #allocation7 [shape = 'u8[65536]{0}', space=vmem, size = 0x10000, scoped, tag = 'input window, operand 3, single buffered']
    #allocation8 [shape = 'u8[2048]{0}', space=vmem, size = 0x800, scoped, tag = 'output window, operand 0, single buffered']
    %10 = vsyncpa [#allocation3], 0
    %11 = vsyncpa [#allocation6], 0
    %12 = vsyncpa [#allocation4], 0
    // Predicated region
    $region2: #{tpu_custom_call.1} parent=1 // pred_check
      _
    $region3: #{tpu_custom_call.1} parent=1 // pred_check_branch
      %14 = sbr.rel (0) target = $region5
    $region4: #{tpu_custom_call.1} parent=1 // pred_region
      %s16 = ssub.s32 64, 64
      %17 = vsyncadd [#allocation3], %s16
      %s19 = sshll.u32 [#allocation2], 4
      %s20 = int_to_ptr.vmem [resolvable:$true] %s19
      %22 = dma.hbm_to_vmem [thread:$0]  %s0, 64, %s20, [#allocation3]
    $region5: #{tpu_custom_call.1} parent=1 // pred_fallthru
      _
    // Predicated region
    $region6: #{tpu_custom_call.1} parent=1 // pred_check
      _
    $region7: #{tpu_custom_call.1} parent=1 // pred_check_branch
      %24 = sbr.rel (0) target = $region9
    $region8: #{tpu_custom_call.1} parent=1 // pred_region
      %s26 = ssub.s32 2048, 2048
      %27 = vsyncadd [#allocation6], %s26
      %s28 = sshll.u32 [#allocation5], 4
      %s29 = int_to_ptr.vmem [resolvable:$true] %s28
      %34 = dma.hbm_to_vmem [thread:$0]  %s1, 2048, %s29, [#allocation6], 128, 128, 8
    $region9: #{tpu_custom_call.1} parent=1 // pred_fallthru
      _
    // Predicated region
    $region10: #{tpu_custom_call.1} parent=1 // pred_check
      _
    $region11: #{tpu_custom_call.1} parent=1 // pred_check_branch
      %36 = sbr.rel (0) target = $region13
    $region12: #{tpu_custom_call.1} parent=1 // pred_region
      _
    $region13: #{tpu_custom_call.1} parent=1 // pred_fallthru
      _
    // Predicated region
    $region14: #{tpu_custom_call.1} parent=1 // pred_check
      _
    $region15: #{tpu_custom_call.1} parent=1 // pred_check_branch
      %38 = sbr.rel (0) target = $region17
    $region16: #{tpu_custom_call.1} parent=1 // pred_region
      %s40 = ssub.s32 2048, 2048
      %41 = vsyncadd [#allocation6], %s40
      %s42 = sshll.u32 [#allocation7], 4
      %s43 = int_to_ptr.vmem [resolvable:$true] %s42
      %48 = dma.hbm_to_vmem [thread:$0]  %s3, 2048, %s43, [#allocation6], 128, 128, 8
    $region17: #{tpu_custom_call.1} parent=1 // pred_fallthru
      _
    // Predicated region
    $region18: #{tpu_custom_call.1} parent=1 // pred_check
      _
    $region19: #{tpu_custom_call.1} parent=1 // pred_check_branch
      %50 = sbr.rel (0) target = $region21
    $region20: #{tpu_custom_call.1} parent=1 // pred_region
      _
    $region21: #{tpu_custom_call.1} parent=1 // pred_fallthru
      _
    // Predicated region
    $region22: #{tpu_custom_call.1} parent=1 // pred_check
      _
    $region23: #{tpu_custom_call.1} parent=1 // pred_check_branch
      %52 = sbr.rel (0) target = $region25
    $region24: #{tpu_custom_call.1} parent=1 // pred_region
      %53 = dma.done [#allocation3], 64
    $region25: #{tpu_custom_call.1} parent=1 // pred_fallthru
      _
    // Predicated region
    $region26: #{tpu_custom_call.1} parent=1 // pred_check
      _
    $region27: #{tpu_custom_call.1} parent=1 // pred_check_branch
      %55 = sbr.rel (0) target = $region29
    $region28: #{tpu_custom_call.1} parent=1 // pred_region
      %56 = dma.done [#allocation6], 2048
    $region29: #{tpu_custom_call.1} parent=1 // pred_fallthru
      _
    // Predicated region
    $region30: #{tpu_custom_call.1} parent=1 // pred_check
      _
    $region31: #{tpu_custom_call.1} parent=1 // pred_check_branch
      %58 = sbr.rel (0) target = $region33
    $region32: #{tpu_custom_call.1} parent=1 // pred_region
      %59 = dma.done [#allocation6], 2048
    $region33: #{tpu_custom_call.1} parent=1 // pred_fallthru
      _
    %v60 = vld [vmem:[#allocation2] sm:$0xf]
    %v61 = vld [vmem:[#allocation5] sm:$0xff]
    %v62 = vld [vmem:[#allocation5 + $0x8] sm:$0xff]
    %v63 = vld [vmem:[#allocation5 + $0x10] sm:$0xff]
    %v64 = vld [vmem:[#allocation5 + $0x18] sm:$0xff]
    %v65 = vld [vmem:[#allocation5 + $0x20] sm:$0xff]
    %v66 = vld [vmem:[#allocation5 + $0x28] sm:$0xff]
    %v67 = vld [vmem:[#allocation5 + $0x30] sm:$0xff]
    %v68 = vld [vmem:[#allocation5 + $0x38] sm:$0xff]
    %v69 = vld [vmem:[#allocation5 + $0x40] sm:$0xff]
    %v70 = vld [vmem:[#allocation5 + $0x48] sm:$0xff]
    %v71 = vld [vmem:[#allocation5 + $0x50] sm:$0xff]
    %v72 = vld [vmem:[#allocation5 + $0x58] sm:$0xff]
    %v73 = vld [vmem:[#allocation5 + $0x60] sm:$0xff]
    %v74 = vld [vmem:[#allocation5 + $0x68] sm:$0xff]
    %v75 = vld [vmem:[#allocation5 + $0x70] sm:$0xff]
    %v76 = vld [vmem:[#allocation5 + $0x78] sm:$0xff]
    %v77 = vld [vmem:[%s2] sm:$0x1]
    %v79 = vlaneseq
    %v80 = vshrl.u32 %v79, 7
    %v81 = vsub.s32 0, %v80
    %v82 = vrot.slane %v77, %v81
    %84 = vmatprep.subr.mxu0 0.0
    %85 = vmatpush1.msra.mxu0 %v76
    %86 = vmatprep.subr.mxu0 0.0
    %87 = vmatpush1.msra.mxu0 %v75
    %88 = vmatprep.subr.mxu0 0.0
    %89 = vmatpush1.msra.mxu0 %v74
    %90 = vmatprep.subr.mxu0 0.0
    %91 = vmatpush1.msra.mxu0 %v73
    %92 = vmatprep.subr.mxu0 0.0
    %93 = vmatpush1.msra.mxu0 %v72
    %94 = vmatprep.subr.mxu0 0.0
    %95 = vmatpush1.msra.mxu0 %v71
    %96 = vmatprep.subr.mxu0 0.0
    %97 = vmatpush1.msra.mxu0 %v70
    %98 = vmatprep.subr.mxu0 0.0
    %99 = vmatpush1.msra.mxu0 %v69
    %100 = vmatprep.subr.mxu0 0.0
    %101 = vmatpush1.msra.mxu0 %v68
    %102 = vmatprep.subr.mxu0 0.0
    %103 = vmatpush1.msra.mxu0 %v67
    %104 = vmatprep.subr.mxu0 0.0
    %105 = vmatpush1.msra.mxu0 %v66
    %106 = vmatprep.subr.mxu0 0.0
    %107 = vmatpush1.msra.mxu0 %v65
    %108 = vmatprep.subr.mxu0 0.0
    %109 = vmatpush1.msra.mxu0 %v64
    %110 = vmatprep.subr.mxu0 0.0
    %111 = vmatpush1.msra.mxu0 %v63
    %112 = vmatprep.subr.mxu0 0.0
    %113 = vmatpush1.msra.mxu0 %v62
    %114 = vmatprep.subr.mxu0 0.0
    %115 = vmatpush1.msra.mxu0 %v61
    %116 = vmatprep.subr.mxu0 0.0
    %117 = vmatpush2.msra.mxu0 0.0
    %118 = vmatprep.subr.mxu0 0.0
    %119 = vmatpush2.msra.mxu0 0.0
    %120 = vmatprep.subr.mxu0 0.0
    %121 = vmatpush2.msra.mxu0 0.0
    %122 = vmatprep.subr.mxu0 0.0
    %123 = vmatpush2.msra.mxu0 0.0
    %124 = vmatprep.subr.mxu0 0.0
    %125 = vmatpush2.msra.mxu0 0.0
    %126 = vmatprep.subr.mxu0 0.0
    %127 = vmatpush2.msra.mxu0 0.0
    %128 = vmatprep.subr.mxu0 0.0
    %129 = vmatpush2.msra.mxu0 0.0
    %130 = vmatprep.subr.mxu0 0.0
    %131 = vmatpush2.msra.mxu0 0.0
    %132 = vmatprep.subr.mxu0 0.0
    %133 = vmatpush2.msra.mxu0 0.0
    %134 = vmatprep.subr.mxu0 0.0
    %135 = vmatpush2.msra.mxu0 0.0
    %136 = vmatprep.subr.mxu0 0.0
    %137 = vmatpush2.msra.mxu0 0.0
    %138 = vmatprep.subr.mxu0 0.0
    %139 = vmatpush2.msra.mxu0 0.0
    %140 = vmatprep.subr.mxu0 0.0
    %141 = vmatpush2.msra.mxu0 0.0
    %142 = vmatprep.subr.mxu0 0.0
    %143 = vmatpush2.msra.mxu0 0.0
    %144 = vmatprep.subr.mxu0 0.0
    %145 = vmatpush2.msra.mxu0 0.0
    %146 = vmatprep.subr.mxu0 0.0
    %147 = vmatpush2.msra.mxu0 0.0
    %148 = vmatprep.mubr.f32.mxu0 0.0
    %149 = vmatmul.mubr.f32.gmra.mxu0 %v60
    %v150 = vpop.f32.mrf.mxu0
    %v151 = vadd.f32 %v82, %v150
    %v152 = vpop.f32.mrf.mxu0
    %153 = vdwg.mxu0
    %v154 = vmul.f32 %v151, 0.5
    %v155 = vmul.f32 %v151, 0.70710677
    %v156 = vand.u32 2147483647, %v155
    %v157 = vmul.f32 %v156, 0.3275911
    %v158 = vadd.f32 %v157, 1.0
    %v159 = vrcp.pop %v158
    %v160 = vmul.f32 1.0, %v159
    %v161 = vmul.f32 %v160, 1.0614054
    %v162 = vadd.f32 %v161, -1.4531521
    %v163 = vmul.f32 %v162, %v160
    %v164 = vadd.f32 %v163, 1.4214138
    %v165 = vmul.f32 %v164, %v160
    %v166 = vadd.f32 %v165, -0.28449672
    %v167 = vmul.f32 %v166, %v160
    %v168 = vadd.f32 %v167, 0.2548296
    %v169 = vmul.f32 %v168, %v160
    %v170 = vsub.f32 0.0, %v156
    %v171 = vmul.f32 %v170, %v156
    %v172 = vmul.f32 %v171, 1.442695
    %v173 = vpow.pop %v172
    %v174 = vmul.f32 %v169, %v173
    %v175 = vsub.f32 1.0, %v174
    %vm176 = vcmp.ge.f32.partialorder %v155, 0.0
    %v177 = vsub.f32 0.0, %v175
    %v178 = vsel %vm176, %v175, %v177
    %v179 = vadd.f32 %v178, 1.0
    %v180 = vmul.f32 %v154, %v179
    %v181 = vld [vmem:[#allocation7] sm:$0xff]
    %v182 = vld [vmem:[#allocation7 + $0x8] sm:$0xff]
    %v183 = vld [vmem:[#allocation7 + $0x10] sm:$0xff]
    %v184 = vld [vmem:[#allocation7 + $0x18] sm:$0xff]
    %v185 = vld [vmem:[#allocation7 + $0x20] sm:$0xff]
    %v186 = vld [vmem:[#allocation7 + $0x28] sm:$0xff]
    %v187 = vld [vmem:[#allocation7 + $0x30] sm:$0xff]
    %v188 = vld [vmem:[#allocation7 + $0x38] sm:$0xff]
    %v189 = vld [vmem:[#allocation7 + $0x40] sm:$0xff]
    %v190 = vld [vmem:[#allocation7 + $0x48] sm:$0xff]
    %v191 = vld [vmem:[#allocation7 + $0x50] sm:$0xff]
    %v192 = vld [vmem:[#allocation7 + $0x58] sm:$0xff]
    %v193 = vld [vmem:[#allocation7 + $0x60] sm:$0xff]
    %v194 = vld [vmem:[#allocation7 + $0x68] sm:$0xff]
    %v195 = vld [vmem:[#allocation7 + $0x70] sm:$0xff]
    %v196 = vld [vmem:[#allocation7 + $0x78] sm:$0xff]
    %v197 = vld [vmem:[%s4] sm:$0x1]
    %v199 = vlaneseq
    %v200 = vshrl.u32 %v199, 7
    %v201 = vsub.s32 0, %v200
    %v202 = vrot.slane %v197, %v201
    %204 = vmatprep.subr.mxu0 0.0
    %205 = vmatpush1.msra.mxu0 %v196
    %206 = vmatprep.subr.mxu0 0.0
    %207 = vmatpush1.msra.mxu0 %v195
    %208 = vmatprep.subr.mxu0 0.0
    %209 = vmatpush1.msra.mxu0 %v194
    %210 = vmatprep.subr.mxu0 0.0
    %211 = vmatpush1.msra.mxu0 %v193
    %212 = vmatprep.subr.mxu0 0.0
    %213 = vmatpush1.msra.mxu0 %v192
    %214 = vmatprep.subr.mxu0 0.0
    %215 = vmatpush1.msra.mxu0 %v191
    %216 = vmatprep.subr.mxu0 0.0
    %217 = vmatpush1.msra.mxu0 %v190
    %218 = vmatprep.subr.mxu0 0.0
    %219 = vmatpush1.msra.mxu0 %v189
    %220 = vmatprep.subr.mxu0 0.0
    %221 = vmatpush1.msra.mxu0 %v188
    %222 = vmatprep.subr.mxu0 0.0
    %223 = vmatpush1.msra.mxu0 %v187
    %224 = vmatprep.subr.mxu0 0.0
    %225 = vmatpush1.msra.mxu0 %v186
    %226 = vmatprep.subr.mxu0 0.0
    %227 = vmatpush1.msra.mxu0 %v185
    %228 = vmatprep.subr.mxu0 0.0
    %229 = vmatpush1.msra.mxu0 %v184
    %230 = vmatprep.subr.mxu0 0.0
    %231 = vmatpush1.msra.mxu0 %v183
    %232 = vmatprep.subr.mxu0 0.0
    %233 = vmatpush1.msra.mxu0 %v182
    %234 = vmatprep.subr.mxu0 0.0
    %235 = vmatpush1.msra.mxu0 %v181
    %236 = vmatprep.subr.mxu0 0.0
    %237 = vmatpush2.msra.mxu0 0.0
    %238 = vmatprep.subr.mxu0 0.0
    %239 = vmatpush2.msra.mxu0 0.0
    %240 = vmatprep.subr.mxu0 0.0
    %241 = vmatpush2.msra.mxu0 0.0
    %242 = vmatprep.subr.mxu0 0.0
    %243 = vmatpush2.msra.mxu0 0.0
    %244 = vmatprep.subr.mxu0 0.0
    %245 = vmatpush2.msra.mxu0 0.0
    %246 = vmatprep.subr.mxu0 0.0
    %247 = vmatpush2.msra.mxu0 0.0
    %248 = vmatprep.subr.mxu0 0.0
    %249 = vmatpush2.msra.mxu0 0.0
    %250 = vmatprep.subr.mxu0 0.0
    %251 = vmatpush2.msra.mxu0 0.0
    %252 = vmatprep.subr.mxu0 0.0
    %253 = vmatpush2.msra.mxu0 0.0
    %254 = vmatprep.subr.mxu0 0.0
    %255 = vmatpush2.msra.mxu0 0.0
    %256 = vmatprep.subr.mxu0 0.0
    %257 = vmatpush2.msra.mxu0 0.0
    %258 = vmatprep.subr.mxu0 0.0
    %259 = vmatpush2.msra.mxu0 0.0
    %260 = vmatprep.subr.mxu0 0.0
    %261 = vmatpush2.msra.mxu0 0.0
    %262 = vmatprep.subr.mxu0 0.0
    %263 = vmatpush2.msra.mxu0 0.0
    %264 = vmatprep.subr.mxu0 0.0
    %265 = vmatpush2.msra.mxu0 0.0
    %266 = vmatprep.subr.mxu0 0.0
    %267 = vmatpush2.msra.mxu0 0.0
    %268 = vmatprep.mubr.f32.mxu0 0.0
    %269 = vmatmul.mubr.f32.gmra.mxu0 %v180
    %v270 = vpop.f32.mrf.mxu0
    %v271 = vadd.f32 %v202, %v270
    %v272 = vpop.f32.mrf.mxu0
    %273 = vdwg.mxu0
    %274 = vst [vmem:[#allocation8] sm:$0xf] %v271
    // Predicated region
    $region34: #{tpu_custom_call.1} parent=1 // pred_check
      _
    $region35: #{tpu_custom_call.1} parent=1 // pred_check_branch
      %276 = sbr.rel (0) target = $region37
    $region36: #{tpu_custom_call.1} parent=1 // pred_region
      %s278 = ssub.s32 64, 64
      %279 = vsyncadd [#allocation4], %s278
      %s281 = sshll.u32 [#allocation8], 4
      %s282 = int_to_ptr.vmem [resolvable:$true] %s281
      %284 = dma.vmem_to_hbm [thread:$0]  %s282, 64, %s5, [#allocation4]
    $region37: #{tpu_custom_call.1} parent=1 // pred_fallthru
      _
    // Predicated region
    $region38: #{tpu_custom_call.1} parent=1 // pred_check
      _
    $region39: #{tpu_custom_call.1} parent=1 // pred_check_branch
      %286 = sbr.rel (0) target = $region41
    $region40: #{tpu_custom_call.1} parent=1 // pred_region
      %287 = dma.done [#allocation4], 64
    $region41: #{tpu_custom_call.1} parent=1 // pred_fallthru
      _
    %288 = vsyncpa [#allocation3], 1
    %289 = vsyncpa [#allocation6], 1
    %290 = vsyncpa [#allocation4], 1

</llo_original>
